<compile_context>
chip_gen: v7x
topology: tpu7x:2x2x1
jax: 0.10.0
libtpu: 0.0.40
codegen_flags: <defaults>
</compile_context>

<pallas_src>
import jax
import jax.numpy as jnp
from jax.experimental import pallas as pl
from jax.experimental.pallas import tpu as pltpu

# ---- fixed module hyper-parameters (SpectralNorm(Conv2d(4, 8, 3, padding=1))) ----
O, C, KH, KW = 8, 4, 3, 3
KDIM = C * KH * KW  # 36
PAD = 1             # conv padding


def spectral_norm_conv2d(x, weight, bias, u):
    """x: (N, C, H, W) f32; weight: (O, C, KH, KW); bias: (O,); u: (O,).

    Returns (out, u_new): out is the conv output (N, O, H, W); u_new is the
    power-iterated u (the PyTorch module recomputes it every forward from the
    fixed buffer).
    """
    N, Cin, H, W = x.shape
    assert Cin == C
    Hp, Wp = H + 2 * PAD, W + 2 * PAD
    out_w = H * Wp                                     # valid output columns (288)
    out_w_pad = ((out_w + 127) // 128) * 128           # lane-dense width (384)
    s_max = (KH - 1) * Wp + (KW - 1)                   # max tap shift (38)
    flat_in = ((max(out_w_pad + s_max, Hp * Wp) + 127) // 128) * 128  # 512
    # Shifted slices read past the real image into the zero pad: keep this
    # guaranteed by construction (see correctness note in the review).
    assert flat_in >= out_w_pad + s_max and flat_in >= Hp * Wp

    # ---- batch packing: G images share one 8-sublane block (row = g*C + c) ----
    G = max(1, min(8 // C, N))                         # 2 for C=4, N>=2
    GC = G * C                                         # 8 (full sublane group)
    NB = -(-N // G)                                    # grid steps
    N_pad = NB * G

    # ---- spectral norm hoisted out of the kernel (pure JAX, 8x36, runs once) ----
    w2d = weight.reshape(O, KDIM)
    wt_u = w2d.T @ u
    v = wt_u / (jnp.linalg.norm(wt_u) + 1e-12)
    wv = w2d @ v
    u_new = wv / (jnp.linalg.norm(wv) + 1e-12)
    sigma = jnp.dot(u_new, wv)

    # tap-major scaled weight: (tap, o, c), then block-diagonal LHS kron(I_G, W)
    w_taps = (weight / sigma).transpose(2, 3, 0, 1).reshape(KH * KW, O, C)
    lhs = jnp.einsum("gh,toc->gothc", jnp.eye(G, dtype=weight.dtype), w_taps)
    lhs = lhs.reshape(G * O, KH * KW * GC)             # (16, 72)
    b_blk = jnp.tile(bias, G).reshape(G * O, 1)        # (16, 1)

    # ---- cheap layout glue on the raw input (NOT im2col: no 9x amplification) ----
    xp = jnp.pad(x, ((0, N_pad - N), (0, 0), (PAD, PAD), (PAD, PAD)))  # (N_pad,C,Hp,Wp)
    xf = xp.reshape(N_pad, C, Hp * Wp)
    xf = jnp.pad(xf, ((0, 0), (0, 0), (0, flat_in - Hp * Wp)))         # zero tail
    xf = xf.reshape(NB, GC, flat_in)                                    # (NB, 8, 512)

    def kernel(l_ref, b_ref, x_ref, o_ref, col_ref):
        xb = x_ref[0]                                   # (GC, flat_in)
        # Build the im2col panel once in VMEM: 9 tile-aligned (8, out_w_pad)
        # stores; this is the single amortized lane-rotation pass.
        for kh in range(KH):
            for kw in range(KW):
                t = kh * KW + kw
                s = kh * Wp + kw
                col_ref[t * GC:(t + 1) * GC, :] = xb[:, s:s + out_w_pad]
        # One fused MXU matmul for all taps (and all packed images) + bias.
        o_ref[0] = (jnp.dot(l_ref[...], col_ref[...],
                            preferred_element_type=jnp.float32)
                    + b_ref[...])

    out_flat = pl.pallas_call(
        kernel,
        out_shape=jax.ShapeDtypeStruct((NB, G * O, out_w_pad), jnp.float32),
        grid_spec=pltpu.PrefetchScalarGridSpec(
            num_scalar_prefetch=0,
            grid=(NB,),
            in_specs=[
                pl.BlockSpec((G * O, KH * KW * GC), lambda n: (0, 0)),  # kron LHS
                pl.BlockSpec((G * O, 1), lambda n: (0, 0)),             # bias
                pl.BlockSpec((1, GC, flat_in), lambda n: (n, 0, 0)),    # packed images
            ],
            out_specs=pl.BlockSpec((1, G * O, out_w_pad), lambda n: (n, 0, 0)),
            scratch_shapes=[pltpu.VMEM((KH * KW * GC, out_w_pad), jnp.float32)],
        ),
        compiler_params=pltpu.CompilerParams(dimension_semantics=("parallel",)),
    )(lhs, b_blk, xf)

    # drop padded lanes / padded-coordinate garbage columns, back to NCHW
    out = out_flat.reshape(N_pad, O, out_w_pad)[:, :, :out_w]
    out = out.reshape(N_pad, O, H, Wp)[:N, :, :, :W]
    return out, u_new


# --------------------------- pure-JAX reference -------------------------------
def _reference(x, weight, bias, u):
    w2d = weight.reshape(O, KDIM)
    wt_u = w2d.T @ u
    v = wt_u / (jnp.linalg.norm(wt_u) + 1e-12)
    wv = w2d @ v
    u_new = wv / (jnp.linalg.norm(wv) + 1e-12)
    sigma = jnp.dot(u_new, wv)
    w_n = weight / sigma
    out = jax.lax.conv_general_dilated(
        x, w_n, window_strides=(1, 1), padding=((PAD, PAD), (PAD, PAD)),
        dimension_numbers=("NCHW", "OIHW", "NCHW"))
    return out + bias.reshape(1, O, 1, 1), u_new


if __name__ == "__main__":
    key = jax.random.PRNGKey(0)
    kx, kwt, kb, ku = jax.random.split(key, 4)

    N, H, W = 2, 16, 16
    x = jax.random.normal(kx, (N, C, H, W), dtype=jnp.float32)
    weight = jax.random.normal(kwt, (O, C, KH, KW), dtype=jnp.float32) * 0.1
    bias = jax.random.normal(kb, (O,), dtype=jnp.float32) * 0.1
    # buffer u: normal(0,1) then l2-normalized, exactly like init_params()
    u0 = jax.random.normal(ku, (O,), dtype=jnp.float32)
    u0 = u0 / (jnp.linalg.norm(u0) + 1e-12)

    out, u_new = spectral_norm_conv2d(x, weight, bias, u0)
    out = jax.block_until_ready(out)

    ref_out, ref_u = _reference(x, weight, bias, u0)
    assert out.shape == (N, O, H, W)
    assert jnp.max(jnp.abs(out - ref_out)) < 1e-4
    assert jnp.max(jnp.abs(u_new - ref_u)) < 1e-4
    print("KERNEL_OK")
</pallas_src>

<mosaic_0001>
module attributes {stable_mosaic.version = 11 : i64} {
  func.func @kernel(%arg0: i32, %arg1: memref<16x72xf32, #tpu.memory_space<vmem>>, %arg2: memref<16x1xf32, #tpu.memory_space<vmem>>, %arg3: memref<1x8x512xf32, #tpu.memory_space<vmem>>, %arg4: memref<1x16x384xf32, #tpu.memory_space<vmem>>, %arg5: memref<72x384xf32, #tpu.memory_space<vmem>>) attributes {dimension_semantics = [#tpu.dimension_semantics<parallel>], iteration_bounds = array<i64: 1>, scalar_prefetch = 0 : i64, scratch_operands = 1 : i64, tpu.core_type = #tpu.core_type<tc>, window_params = [{pipeline_mode = #tpu.pipeline_mode<synchronous>, transform_indices = @transform_0, window_bounds = array<i64: 16, 72>}, {pipeline_mode = #tpu.pipeline_mode<synchronous>, transform_indices = @transform_1, window_bounds = array<i64: 16, 1>}, {transform_indices = @transform_2, window_bounds = array<i64: 1, 8, 512>}, {transform_indices = @transform_3, window_bounds = array<i64: 1, 16, 384>}]} {
    %c0 = arith.constant 0 : index
    %c0_0 = arith.constant 0 : index
    %c0_1 = arith.constant 0 : index
    %0 = vector.load %arg3[%c0, %c0_0, %c0_1] : memref<1x8x512xf32, #tpu.memory_space<vmem>>, vector<1x8x512xf32>
    %1 = vector.shape_cast %0 : vector<1x8x512xf32> to vector<8x512xf32>
    %2 = vector.extract_strided_slice %1 {offsets = [0, 0], sizes = [8, 384], strides = [1, 1]} : vector<8x512xf32> to vector<8x384xf32>
    %c0_2 = arith.constant 0 : index
    %c0_3 = arith.constant 0 : index
    %3 = vector.load %arg5[%c0_2, %c0_3] : memref<72x384xf32, #tpu.memory_space<vmem>>, vector<8x384xf32>
    tpu.vector_store %arg5[%c0_2, %c0_3], %2 {strides = array<i32>} : memref<72x384xf32, #tpu.memory_space<vmem>>, vector<8x384xf32>,
    %4 = vector.extract_strided_slice %1 {offsets = [0, 1], sizes = [8, 384], strides = [1, 1]} : vector<8x512xf32> to vector<8x384xf32>
    %c8 = arith.constant 8 : index
    %c0_4 = arith.constant 0 : index
    %5 = vector.load %arg5[%c8, %c0_4] : memref<72x384xf32, #tpu.memory_space<vmem>>, vector<8x384xf32>
    tpu.vector_store %arg5[%c8, %c0_4], %4 {strides = array<i32>} : memref<72x384xf32, #tpu.memory_space<vmem>>, vector<8x384xf32>,
    %6 = vector.extract_strided_slice %1 {offsets = [0, 2], sizes = [8, 384], strides = [1, 1]} : vector<8x512xf32> to vector<8x384xf32>
    %c16 = arith.constant 16 : index
    %c0_5 = arith.constant 0 : index
    %7 = vector.load %arg5[%c16, %c0_5] : memref<72x384xf32, #tpu.memory_space<vmem>>, vector<8x384xf32>
    tpu.vector_store %arg5[%c16, %c0_5], %6 {strides = array<i32>} : memref<72x384xf32, #tpu.memory_space<vmem>>, vector<8x384xf32>,
    %8 = vector.extract_strided_slice %1 {offsets = [0, 18], sizes = [8, 384], strides = [1, 1]} : vector<8x512xf32> to vector<8x384xf32>
    %c24 = arith.constant 24 : index
    %c0_6 = arith.constant 0 : index
    %9 = vector.load %arg5[%c24, %c0_6] : memref<72x384xf32, #tpu.memory_space<vmem>>, vector<8x384xf32>
    tpu.vector_store %arg5[%c24, %c0_6], %8 {strides = array<i32>} : memref<72x384xf32, #tpu.memory_space<vmem>>, vector<8x384xf32>,
    %10 = vector.extract_strided_slice %1 {offsets = [0, 19], sizes = [8, 384], strides = [1, 1]} : vector<8x512xf32> to vector<8x384xf32>
    %c32 = arith.constant 32 : index
    %c0_7 = arith.constant 0 : index
    %11 = vector.load %arg5[%c32, %c0_7] : memref<72x384xf32, #tpu.memory_space<vmem>>, vector<8x384xf32>
    tpu.vector_store %arg5[%c32, %c0_7], %10 {strides = array<i32>} : memref<72x384xf32, #tpu.memory_space<vmem>>, vector<8x384xf32>,
    %12 = vector.extract_strided_slice %1 {offsets = [0, 20], sizes = [8, 384], strides = [1, 1]} : vector<8x512xf32> to vector<8x384xf32>
    %c40 = arith.constant 40 : index
    %c0_8 = arith.constant 0 : index
    %13 = vector.load %arg5[%c40, %c0_8] : memref<72x384xf32, #tpu.memory_space<vmem>>, vector<8x384xf32>
    tpu.vector_store %arg5[%c40, %c0_8], %12 {strides = array<i32>} : memref<72x384xf32, #tpu.memory_space<vmem>>, vector<8x384xf32>,
    %14 = vector.extract_strided_slice %1 {offsets = [0, 36], sizes = [8, 384], strides = [1, 1]} : vector<8x512xf32> to vector<8x384xf32>
    %c48 = arith.constant 48 : index
    %c0_9 = arith.constant 0 : index
    %15 = vector.load %arg5[%c48, %c0_9] : memref<72x384xf32, #tpu.memory_space<vmem>>, vector<8x384xf32>
    tpu.vector_store %arg5[%c48, %c0_9], %14 {strides = array<i32>} : memref<72x384xf32, #tpu.memory_space<vmem>>, vector<8x384xf32>,
    %16 = vector.extract_strided_slice %1 {offsets = [0, 37], sizes = [8, 384], strides = [1, 1]} : vector<8x512xf32> to vector<8x384xf32>
    %c56 = arith.constant 56 : index
    %c0_10 = arith.constant 0 : index
    %17 = vector.load %arg5[%c56, %c0_10] : memref<72x384xf32, #tpu.memory_space<vmem>>, vector<8x384xf32>
    tpu.vector_store %arg5[%c56, %c0_10], %16 {strides = array<i32>} : memref<72x384xf32, #tpu.memory_space<vmem>>, vector<8x384xf32>,
    %18 = vector.extract_strided_slice %1 {offsets = [0, 38], sizes = [8, 384], strides = [1, 1]} : vector<8x512xf32> to vector<8x384xf32>
    %c64 = arith.constant 64 : index
    %c0_11 = arith.constant 0 : index
    %19 = vector.load %arg5[%c64, %c0_11] : memref<72x384xf32, #tpu.memory_space<vmem>>, vector<8x384xf32>
    tpu.vector_store %arg5[%c64, %c0_11], %18 {strides = array<i32>} : memref<72x384xf32, #tpu.memory_space<vmem>>, vector<8x384xf32>,
    %c0_12 = arith.constant 0 : index
    %c0_13 = arith.constant 0 : index
    %20 = vector.load %arg1[%c0_12, %c0_13] : memref<16x72xf32, #tpu.memory_space<vmem>>, vector<16x72xf32>
    %c0_14 = arith.constant 0 : index
    %c0_15 = arith.constant 0 : index
    %21 = vector.load %arg5[%c0_14, %c0_15] : memref<72x384xf32, #tpu.memory_space<vmem>>, vector<72x384xf32>
    %cst = arith.constant dense<0.000000e+00> : vector<16x384xf32>
    %22 = tpu.matmul %20, %21, %cst {dimension_numbers = #tpu.dot_dimension_numbers<[1], [0], [0], [1], [0, 0, 1, 1], [], []>} : vector<16x72xf32>, vector<72x384xf32>, vector<16x384xf32> -> vector<16x384xf32>
    %c0_16 = arith.constant 0 : index
    %c0_17 = arith.constant 0 : index
    %23 = vector.load %arg2[%c0_16, %c0_17] : memref<16x1xf32, #tpu.memory_space<vmem>>, vector<16x1xf32>
    %24 = vector.broadcast %23 : vector<16x1xf32> to vector<16x384xf32>
    %25 = arith.addf %22, %24 : vector<16x384xf32>
    %c0_18 = arith.constant 0 : index
    %c0_19 = arith.constant 0 : index
    %c0_20 = arith.constant 0 : index
    %26 = vector.load %arg4[%c0_18, %c0_19, %c0_20] : memref<1x16x384xf32, #tpu.memory_space<vmem>>, vector<1x16x384xf32>
    %27 = vector.shape_cast %26 : vector<1x16x384xf32> to vector<16x384xf32>
    %28 = vector.shape_cast %25 : vector<16x384xf32> to vector<1x16x384xf32>
    tpu.vector_store %arg4[%c0_18, %c0_19, %c0_20], %28 {strides = array<i32>} : memref<1x16x384xf32, #tpu.memory_space<vmem>>, vector<1x16x384xf32>,
    return
  }
  func.func @transform_0(%arg0: i32) -> (i32, i32) {
    %c0_i32 = arith.constant 0 : i32
    %c0_i32_0 = arith.constant 0 : i32
    %c0_i32_1 = arith.constant 0 : i32
    return %c0_i32, %c0_i32_0 : i32, i32
  }
  func.func @transform_1(%arg0: i32) -> (i32, i32) {
    %c0_i32 = arith.constant 0 : i32
    %c0_i32_0 = arith.constant 0 : i32
    %c0_i32_1 = arith.constant 0 : i32
    return %c0_i32, %c0_i32_0 : i32, i32
  }
  func.func @transform_2(%arg0: i32) -> (i32, i32, i32) {
    %c0_i32 = arith.constant 0 : i32
    %c0_i32_0 = arith.constant 0 : i32
    %c0_i32_1 = arith.constant 0 : i32
    return %arg0, %c0_i32, %c0_i32_0 : i32, i32, i32
  }
  func.func @transform_3(%arg0: i32) -> (i32, i32, i32) {
    %c0_i32 = arith.constant 0 : i32
    %c0_i32_0 = arith.constant 0 : i32
    %c0_i32_1 = arith.constant 0 : i32
    return %arg0, %c0_i32, %c0_i32_0 : i32, i32, i32
  }
}

</mosaic_0001>

<llo_original>
// kernel: tpu_custom_call.1
$region0: #{tpu_custom_call.1}
  #allocation0 [shape = 'u32[]', space=smem, size = 0x4, offset = 0x4, fixed_abs, tag = 'smem constant byte address 0x4 - core index']
  #allocation1 [shape = 'u32[144,128]{1,0:T(1,128)}', space=vmem, size = 0x12000, scoped, tag = 'internal scratch']
  #allocation2 [shape = 'f32[72,384]{1,0:T(8,128)}', space=vmem, size = 0x1b000, scoped, tag = 'scratch operand']
  %s0 = inlined_call_operand.vmem [shape: f32[16,72], index: 0, kind: input, shape index: {}]
  %s1 = inlined_call_operand.vmem [shape: f32[16,1], index: 1, kind: input, shape index: {}]
  %s2 = inlined_call_operand.hbm [shape: f32[1,8,512], index: 2, kind: input, shape index: {}]
  %s3 = inlined_call_operand.hbm [shape: f32[1,16,384], index: 3, kind: output, shape index: {}]
  %s4 = sld [smem:[#allocation0]]
  $region26: #{tpu_custom_call.1} parent=0
    _
  %s6 = ssub.s32 1, %s4
  %s7 = scalar_select 0, %s6, %s4
  $region1: #{tpu_custom_call.1} parent=0
    #allocation3 [shape = 'u8[16384]{0}', space=vmem, size = 0x4000, scoped, tag = 'input window, operand 2, single buffered']
    #allocation4 [shape = 's32[1]{0}', space=sflag, size = 0x4, scoped, tag = 'scoped memory for tpu_custom_call.1']
    #allocation5 [shape = 's32[1]{0}', space=sflag, size = 0x4, scoped, tag = 'scoped memory for tpu_custom_call.1']
    #allocation6 [shape = 'u8[24576]{0}', space=vmem, size = 0x6000, scoped, tag = 'output window, operand 0, single buffered']
    %8 = vsyncpa [#allocation4], 0
    %9 = vsyncpa [#allocation5], 0
    // Predicated region
    $region2: #{tpu_custom_call.1} parent=1 // pred_check
      _
    $region3: #{tpu_custom_call.1} parent=1 // pred_check_branch
      %11 = sbr.rel (0) target = $region5
    $region4: #{tpu_custom_call.1} parent=1 // pred_region
      _
    $region5: #{tpu_custom_call.1} parent=1 // pred_fallthru
      _
    // Predicated region
    $region6: #{tpu_custom_call.1} parent=1 // pred_check
      _
    $region7: #{tpu_custom_call.1} parent=1 // pred_check_branch
      %13 = sbr.rel (0) target = $region9
    $region8: #{tpu_custom_call.1} parent=1 // pred_region
      _
    $region9: #{tpu_custom_call.1} parent=1 // pred_fallthru
      _
    // Predicated region
    $region10: #{tpu_custom_call.1} parent=1 // pred_check
      _
    $region11: #{tpu_custom_call.1} parent=1 // pred_check_branch
      %15 = sbr.rel (0) target = $region13
    $region12: #{tpu_custom_call.1} parent=1 // pred_region
      %s17 = ssub.s32 512, 512
      %18 = vsyncadd [#allocation4], %s17
      %s20 = sshll.u32 [#allocation3], 4
      %s21 = int_to_ptr.vmem [resolvable:$true] %s20
      %23 = dma.hbm_to_vmem [thread:$0]  %s2, 512, %s21, [#allocation4]
    $region13: #{tpu_custom_call.1} parent=1 // pred_fallthru
      _
    // Predicated region
    $region14: #{tpu_custom_call.1} parent=1 // pred_check
      _
    $region15: #{tpu_custom_call.1} parent=1 // pred_check_branch
      %25 = sbr.rel (0) target = $region17
    $region16: #{tpu_custom_call.1} parent=1 // pred_region
      %26 = dma.done [#allocation4], 512
    $region17: #{tpu_custom_call.1} parent=1 // pred_fallthru
      _
    %v27 = vld [vmem:[#allocation3] sm:$0xff]
    %v28 = vld [vmem:[#allocation3 + $0x8] sm:$0xff]
    %v29 = vld [vmem:[#allocation3 + $0x10] sm:$0xff]
    %v30 = vld [vmem:[#allocation3 + $0x18] sm:$0xff]
    %31 = vst [vmem:[#allocation2] sm:$0xff] %v27
    %32 = vst [vmem:[#allocation2 + $0x8] sm:$0xff] %v28
    %33 = vst [vmem:[#allocation2 + $0x10] sm:$0xff] %v29
    %38 = vrot.lane.b32.xlu0 %v27, 127
    %v39 = vpop.permute.xlu0 %38
    %40 = vrot.lane.b32.xlu0 %v28, 127
    %v41 = vpop.permute.xlu0 %40
    %42 = vrot.lane.b32.xlu0 %v29, 127
    %v43 = vpop.permute.xlu0 %42
    %44 = vrot.lane.b32.xlu0 %v30, 127
    %v45 = vpop.permute.xlu0 %44
    %vm46 = vcmask 1039360
    %v47 = vsel %vm46, %v39, %v41
    %v48 = vsel %vm46, %v41, %v43
    %v49 = vsel %vm46, %v43, %v45
    %53 = vst [vmem:[#allocation2 + $0x18] sm:$0xff] %v47
    %54 = vst [vmem:[#allocation2 + $0x20] sm:$0xff] %v48
    %55 = vst [vmem:[#allocation2 + $0x28] sm:$0xff] %v49
    %56 = vrot.lane.b32.xlu0 %v27, 126
    %v57 = vpop.permute.xlu0 %56
    %58 = vrot.lane.b32.xlu0 %v28, 126
    %v59 = vpop.permute.xlu0 %58
    %60 = vrot.lane.b32.xlu0 %v29, 126
    %v61 = vpop.permute.xlu0 %60
    %62 = vrot.lane.b32.xlu0 %v30, 126
    %v63 = vpop.permute.xlu0 %62
    %vm64 = vcmask 1031168
    %v65 = vsel %vm64, %v57, %v59
    %v66 = vsel %vm64, %v59, %v61
    %v67 = vsel %vm64, %v61, %v63
    %71 = vst [vmem:[#allocation2 + $0x30] sm:$0xff] %v65
    %72 = vst [vmem:[#allocation2 + $0x38] sm:$0xff] %v66
    %73 = vst [vmem:[#allocation2 + $0x40] sm:$0xff] %v67
    %74 = vrot.lane.b32.xlu0 %v27, 110
    %v75 = vpop.permute.xlu0 %74
    %76 = vrot.lane.b32.xlu0 %v28, 110
    %v77 = vpop.permute.xlu0 %76
    %78 = vrot.lane.b32.xlu0 %v29, 110
    %v79 = vpop.permute.xlu0 %78
    %80 = vrot.lane.b32.xlu0 %v30, 110
    %v81 = vpop.permute.xlu0 %80
    %vm82 = vcmask 900096
    %v83 = vsel %vm82, %v75, %v77
    %v84 = vsel %vm82, %v77, %v79
    %v85 = vsel %vm82, %v79, %v81
    %89 = vst [vmem:[#allocation2 + $0x48] sm:$0xff] %v83
    %90 = vst [vmem:[#allocation2 + $0x50] sm:$0xff] %v84
    %91 = vst [vmem:[#allocation2 + $0x58] sm:$0xff] %v85
    %92 = vrot.lane.b32.xlu0 %v27, 109
    %v93 = vpop.permute.xlu0 %92
    %94 = vrot.lane.b32.xlu0 %v28, 109
    %v95 = vpop.permute.xlu0 %94
    %96 = vrot.lane.b32.xlu0 %v29, 109
    %v97 = vpop.permute.xlu0 %96
    %98 = vrot.lane.b32.xlu0 %v30, 109
    %v99 = vpop.permute.xlu0 %98
    %vm100 = vcmask 891904
    %v101 = vsel %vm100, %v93, %v95
    %v102 = vsel %vm100, %v95, %v97
    %v103 = vsel %vm100, %v97, %v99
    %107 = vst [vmem:[#allocation2 + $0x60] sm:$0xff] %v101
    %108 = vst [vmem:[#allocation2 + $0x68] sm:$0xff] %v102
    %109 = vst [vmem:[#allocation2 + $0x70] sm:$0xff] %v103
    %110 = vrot.lane.b32.xlu0 %v27, 108
    %v111 = vpop.permute.xlu0 %110
    %112 = vrot.lane.b32.xlu0 %v28, 108
    %v113 = vpop.permute.xlu0 %112
    %114 = vrot.lane.b32.xlu0 %v29, 108
    %v115 = vpop.permute.xlu0 %114
    %116 = vrot.lane.b32.xlu0 %v30, 108
    %v117 = vpop.permute.xlu0 %116
    %vm118 = vcmask 883712
    %v119 = vsel %vm118, %v111, %v113
    %v120 = vsel %vm118, %v113, %v115
    %v121 = vsel %vm118, %v115, %v117
    %125 = vst [vmem:[#allocation2 + $0x78] sm:$0xff] %v119
    %126 = vst [vmem:[#allocation2 + $0x80] sm:$0xff] %v120
    %127 = vst [vmem:[#allocation2 + $0x88] sm:$0xff] %v121
    %128 = vrot.lane.b32.xlu0 %v27, 92
    %v129 = vpop.permute.xlu0 %128
    %130 = vrot.lane.b32.xlu0 %v28, 92
    %v131 = vpop.permute.xlu0 %130
    %132 = vrot.lane.b32.xlu0 %v29, 92
    %v133 = vpop.permute.xlu0 %132
    %134 = vrot.lane.b32.xlu0 %v30, 92
    %v135 = vpop.permute.xlu0 %134
    %vm136 = vcmask 752640
    %v137 = vsel %vm136, %v129, %v131
    %v138 = vsel %vm136, %v131, %v133
    %v139 = vsel %vm136, %v133, %v135
    %143 = vst [vmem:[#allocation2 + $0x90] sm:$0xff] %v137
    %144 = vst [vmem:[#allocation2 + $0x98] sm:$0xff] %v138
    %145 = vst [vmem:[#allocation2 + $0xa0] sm:$0xff] %v139
    %146 = vrot.lane.b32.xlu0 %v27, 91
    %v147 = vpop.permute.xlu0 %146
    %148 = vrot.lane.b32.xlu0 %v28, 91
    %v149 = vpop.permute.xlu0 %148
    %150 = vrot.lane.b32.xlu0 %v29, 91
    %v151 = vpop.permute.xlu0 %150
    %152 = vrot.lane.b32.xlu0 %v30, 91
    %v153 = vpop.permute.xlu0 %152
    %vm154 = vcmask 744448
    %v155 = vsel %vm154, %v147, %v149
    %v156 = vsel %vm154, %v149, %v151
    %v157 = vsel %vm154, %v151, %v153
    %161 = vst [vmem:[#allocation2 + $0xa8] sm:$0xff] %v155
    %162 = vst [vmem:[#allocation2 + $0xb0] sm:$0xff] %v156
    %163 = vst [vmem:[#allocation2 + $0xb8] sm:$0xff] %v157
    %164 = vrot.lane.b32.xlu0 %v27, 90
    %v165 = vpop.permute.xlu0 %164
    %166 = vrot.lane.b32.xlu0 %v28, 90
    %v167 = vpop.permute.xlu0 %166
    %168 = vrot.lane.b32.xlu0 %v29, 90
    %v169 = vpop.permute.xlu0 %168
    %170 = vrot.lane.b32.xlu0 %v30, 90
    %v171 = vpop.permute.xlu0 %170
    %vm172 = vcmask 736256
    %v173 = vsel %vm172, %v165, %v167
    %v174 = vsel %vm172, %v167, %v169
    %v175 = vsel %vm172, %v169, %v171
    %179 = vst [vmem:[#allocation2 + $0xc0] sm:$0xff] %v173
    %180 = vst [vmem:[#allocation2 + $0xc8] sm:$0xff] %v174
    %181 = vst [vmem:[#allocation2 + $0xd0] sm:$0xff] %v175
    %v182 = vld [vmem:[%s0] sm:$0xff]
    %v183 = vld [vmem:[%s0 + $0x8] sm:$0xff]
    %v184 = vld [vmem:[#allocation2] sm:$0xff]
    %v185 = vld [vmem:[#allocation2 + $0x8] sm:$0xff]
    %v186 = vld [vmem:[#allocation2 + $0x10] sm:$0xff]
    %v187 = vld [vmem:[#allocation2 + $0x18] sm:$0xff]
    %v188 = vld [vmem:[#allocation2 + $0x20] sm:$0xff]
    %v189 = vld [vmem:[#allocation2 + $0x28] sm:$0xff]
    %v190 = vld [vmem:[#allocation2 + $0x30] sm:$0xff]
    %v191 = vld [vmem:[#allocation2 + $0x38] sm:$0xff]
    %v192 = vld [vmem:[#allocation2 + $0x40] sm:$0xff]
    %v193 = vld [vmem:[#allocation2 + $0x48] sm:$0xff]
    %v194 = vld [vmem:[#allocation2 + $0x50] sm:$0xff]
    %v195 = vld [vmem:[#allocation2 + $0x58] sm:$0xff]
    %v196 = vld [vmem:[#allocation2 + $0x60] sm:$0xff]
    %v197 = vld [vmem:[#allocation2 + $0x68] sm:$0xff]
    %v198 = vld [vmem:[#allocation2 + $0x70] sm:$0xff]
    %v199 = vld [vmem:[#allocation2 + $0x78] sm:$0xff]
    %v200 = vld [vmem:[#allocation2 + $0x80] sm:$0xff]
    %v201 = vld [vmem:[#allocation2 + $0x88] sm:$0xff]
    %v202 = vld [vmem:[#allocation2 + $0x90] sm:$0xff]
    %v203 = vld [vmem:[#allocation2 + $0x98] sm:$0xff]
    %v204 = vld [vmem:[#allocation2 + $0xa0] sm:$0xff]
    %v205 = vld [vmem:[#allocation2 + $0xa8] sm:$0xff]
    %v206 = vld [vmem:[#allocation2 + $0xb0] sm:$0xff]
    %v207 = vld [vmem:[#allocation2 + $0xb8] sm:$0xff]
    %v208 = vld [vmem:[#allocation2 + $0xc0] sm:$0xff]
    %v209 = vld [vmem:[#allocation2 + $0xc8] sm:$0xff]
    %v210 = vld [vmem:[#allocation2 + $0xd0] sm:$0xff]
    %v211 = vld [vmem:[%s1] sm:$0xff]
    %v212 = vld [vmem:[%s1 + $0x8] sm:$0xff]
    %214 = vset.pattern.permute.xlu0 0
    %215 = vperm.xlu0 %214, %v211
    %v216 = vpop.permute.xlu0 %215
    %219 = vset.pattern.permute.xlu0 0
    %220 = vperm.xlu0 %219, %v212
    %v221 = vpop.permute.xlu0 %220
    %vm223 = vcmask 588800
    %v225 = vsel %vm223, %v182, 0
    %v228 = vsel %vm223, %v183, 0
    %230 = vmatprep.subr.mxu0 %v185
    %231 = vmatpush1.msra.mxu0 %v184
    %232 = vmatprep.subr.mxu0 %v188
    %233 = vmatpush1.msra.mxu0 %v187
    %234 = vmatprep.subr.mxu0 %v191
    %235 = vmatpush1.msra.mxu0 %v190
    %236 = vmatprep.subr.mxu0 %v194
    %237 = vmatpush1.msra.mxu0 %v193
    %238 = vmatprep.subr.mxu0 %v197
    %239 = vmatpush1.msra.mxu0 %v196
    %240 = vmatprep.subr.mxu0 %v200
    %241 = vmatpush1.msra.mxu0 %v199
    %242 = vmatprep.subr.mxu0 %v203
    %243 = vmatpush1.msra.mxu0 %v202
    %244 = vmatprep.subr.mxu0 %v206
    %245 = vmatpush1.msra.mxu0 %v205
    %246 = vmatprep.subr.mxu0 %v209
    %247 = vmatpush1.msra.mxu0 %v208
    %248 = vmatprep.subr.mxu0 0.0
    %249 = vmatpush1.msra.mxu0 0.0
    %250 = vmatprep.subr.mxu0 0.0
    %251 = vmatpush1.msra.mxu0 0.0
    %252 = vmatprep.subr.mxu0 0.0
    %253 = vmatpush1.msra.mxu0 0.0
    %254 = vmatprep.subr.mxu0 0.0
    %255 = vmatpush1.msra.mxu0 0.0
    %256 = vmatprep.subr.mxu0 0.0
    %257 = vmatpush1.msra.mxu0 0.0
    %258 = vmatprep.subr.mxu0 0.0
    %259 = vmatpush1.msra.mxu0 0.0
    %260 = vmatprep.subr.mxu0 0.0
    %261 = vmatpush1.msra.mxu0 0.0
    %262 = vmatprep.subr.mxu0 0.0
    %263 = vmatpush1.msra.mxu0 0.0
    %264 = vmatprep.subr.mxu0 0.0
    %265 = vmatpush1.msra.mxu0 0.0
    %266 = vmatprep.subr.mxu0 0.0
    %267 = vmatpush1.msra.mxu0 0.0
    %268 = vmatprep.subr.mxu0 0.0
    %269 = vmatpush1.msra.mxu0 0.0
    %270 = vmatprep.subr.mxu0 0.0
    %271 = vmatpush1.msra.mxu0 0.0
    %272 = vmatprep.subr.mxu0 0.0
    %273 = vmatpush1.msra.mxu0 0.0
    %274 = vmatprep.subr.mxu0 0.0
    %275 = vmatpush1.msra.mxu0 0.0
    %276 = vmatprep.subr.mxu0 0.0
    %277 = vmatpush1.msra.mxu0 0.0
    %278 = vmatprep.subr.mxu0 0.0
    %279 = vmatpush1.msra.mxu0 0.0
    %280 = vmatprep.subr.mxu0 0.0
    %281 = vmatpush1.msra.mxu0 0.0
    %282 = vmatprep.subr.mxu0 0.0
    %283 = vmatpush1.msra.mxu0 0.0
    %284 = vmatprep.subr.mxu0 0.0
    %285 = vmatpush1.msra.mxu0 0.0
    %286 = vmatprep.subr.mxu0 0.0
    %287 = vmatpush1.msra.mxu0 0.0
    %288 = vmatprep.subr.mxu0 0.0
    %289 = vmatpush1.msra.mxu0 0.0
    %290 = vmatprep.subr.mxu0 0.0
    %291 = vmatpush1.msra.mxu0 0.0
    %292 = vmatprep.subr.mxu0 0.0
    %293 = vmatpush1.msra.mxu0 0.0
    %294 = vmatprep.mubr.f32.mxu0 0.0
    %295 = vmatmul.mubr.f32.gmra.mrb[0].mxu0 %v225
    %v296 = vpop.f32.mrb[0].mxu0
    %v297 = vadd.f32 %v216, %v296
    %v298 = vpop.f32.mrb[0].mxu0
    %v299 = vadd.f32 %v216, %v298
    %300 = vmatprep.mubr.f32.mxu0 0.0
    %301 = vmatmul.mubr.f32.gmra.mrb[0].mxu0 %v228
    %v302 = vpop.f32.mrb[0].mxu0
    %v303 = vadd.f32 %v221, %v302
    %v304 = vpop.f32.mrb[0].mxu0
    %v305 = vadd.f32 %v221, %v304
    %306 = vdwg.mxu0
    %307 = vmatprep.subr.mxu0 0.0
    %308 = vmatpush1.msra.mxu0 %v186
    %309 = vmatprep.subr.mxu0 0.0
    %310 = vmatpush1.msra.mxu0 %v189
    %311 = vmatprep.subr.mxu0 0.0
    %312 = vmatpush1.msra.mxu0 %v192
    %313 = vmatprep.subr.mxu0 0.0
    %314 = vmatpush1.msra.mxu0 %v195
    %315 = vmatprep.subr.mxu0 0.0
    %316 = vmatpush1.msra.mxu0 %v198
    %317 = vmatprep.subr.mxu0 0.0
    %318 = vmatpush1.msra.mxu0 %v201
    %319 = vmatprep.subr.mxu0 0.0
    %320 = vmatpush1.msra.mxu0 %v204
    %321 = vmatprep.subr.mxu0 0.0
    %322 = vmatpush1.msra.mxu0 %v207
    %323 = vmatprep.subr.mxu0 0.0
    %324 = vmatpush1.msra.mxu0 %v210
    %325 = vmatprep.subr.mxu0 0.0
    %326 = vmatpush1.msra.mxu0 0.0
    %327 = vmatprep.subr.mxu0 0.0
    %328 = vmatpush1.msra.mxu0 0.0
    %329 = vmatprep.subr.mxu0 0.0
    %330 = vmatpush1.msra.mxu0 0.0
    %331 = vmatprep.subr.mxu0 0.0
    %332 = vmatpush1.msra.mxu0 0.0
    %333 = vmatprep.subr.mxu0 0.0
    %334 = vmatpush1.msra.mxu0 0.0
    %335 = vmatprep.subr.mxu0 0.0
    %336 = vmatpush1.msra.mxu0 0.0
    %337 = vmatprep.subr.mxu0 0.0
    %338 = vmatpush1.msra.mxu0 0.0
    %339 = vmatprep.subr.mxu0 0.0
    %340 = vmatpush1.msra.mxu0 0.0
    %341 = vmatprep.subr.mxu0 0.0
    %342 = vmatpush1.msra.mxu0 0.0
    %343 = vmatprep.subr.mxu0 0.0
    %344 = vmatpush1.msra.mxu0 0.0
    %345 = vmatprep.subr.mxu0 0.0
    %346 = vmatpush1.msra.mxu0 0.0
    %347 = vmatprep.subr.mxu0 0.0
    %348 = vmatpush1.msra.mxu0 0.0
    %349 = vmatprep.subr.mxu0 0.0
    %350 = vmatpush1.msra.mxu0 0.0
    %351 = vmatprep.subr.mxu0 0.0
    %352 = vmatpush1.msra.mxu0 0.0
    %353 = vmatprep.subr.mxu0 0.0
    %354 = vmatpush1.msra.mxu0 0.0
    %355 = vmatprep.subr.mxu0 0.0
    %356 = vmatpush1.msra.mxu0 0.0
    %357 = vmatprep.subr.mxu0 0.0
    %358 = vmatpush1.msra.mxu0 0.0
    %359 = vmatprep.subr.mxu0 0.0
    %360 = vmatpush1.msra.mxu0 0.0
    %361 = vmatprep.subr.mxu0 0.0
    %362 = vmatpush1.msra.mxu0 0.0
    %363 = vmatprep.subr.mxu0 0.0
    %364 = vmatpush1.msra.mxu0 0.0
    %365 = vmatprep.subr.mxu0 0.0
    %366 = vmatpush1.msra.mxu0 0.0
    %367 = vmatprep.subr.mxu0 0.0
    %368 = vmatpush1.msra.mxu0 0.0
    %369 = vmatprep.subr.mxu0 0.0
    %370 = vmatpush1.msra.mxu0 0.0
    %371 = vmatprep.mubr.f32.mxu0 0.0
    %372 = vmatmul.mubr.f32.gmra.mrb[0].mxu0 %v225
    %v373 = vpop.f32.mrb[0].mxu0
    %v374 = vadd.f32 %v216, %v373
    %v375 = vpop.f32.mrb[0].mxu0
    %376 = vmatprep.mubr.f32.mxu0 0.0
    %377 = vmatmul.mubr.f32.gmra.mrb[0].mxu0 %v228
    %v378 = vpop.f32.mrb[0].mxu0
    %v379 = vadd.f32 %v221, %v378
    %v380 = vpop.f32.mrb[0].mxu0
    %381 = vdwg.mxu0
    %382 = vst [vmem:[#allocation6] sm:$0xff] %v297
    %383 = vst [vmem:[#allocation6 + $0x8] sm:$0xff] %v299
    %384 = vst [vmem:[#allocation6 + $0x10] sm:$0xff] %v374
    %385 = vst [vmem:[#allocation6 + $0x18] sm:$0xff] %v303
    %386 = vst [vmem:[#allocation6 + $0x20] sm:$0xff] %v305
    %387 = vst [vmem:[#allocation6 + $0x28] sm:$0xff] %v379
    // Predicated region
    $region18: #{tpu_custom_call.1} parent=1 // pred_check
      _
    $region19: #{tpu_custom_call.1} parent=1 // pred_check_branch
      %389 = sbr.rel (0) target = $region21
    $region20: #{tpu_custom_call.1} parent=1 // pred_region
      %s391 = ssub.s32 768, 768
      %392 = vsyncadd [#allocation5], %s391
      %s393 = sshll.u32 [#allocation6], 4
      %s394 = int_to_ptr.vmem [resolvable:$true] %s393
      %399 = dma.vmem_to_hbm [thread:$0]  %s394, 768, %s3, [#allocation5], 384, 384, 24
    $region21: #{tpu_custom_call.1} parent=1 // pred_fallthru
      _
    // Predicated region
    $region22: #{tpu_custom_call.1} parent=1 // pred_check
      _
    $region23: #{tpu_custom_call.1} parent=1 // pred_check_branch
      %401 = sbr.rel (0) target = $region25
    $region24: #{tpu_custom_call.1} parent=1 // pred_region
      %402 = dma.done [#allocation5], 768
    $region25: #{tpu_custom_call.1} parent=1 // pred_fallthru
      _
    %403 = vsyncpa [#allocation4], 1
    %404 = vsyncpa [#allocation5], 1

</llo_original>
